<compile_context>
chip_gen: v7x
topology: tpu7x:2x2x1
jax: 0.10.0
libtpu: 0.0.40
codegen_flags: <defaults>
</compile_context>

<pallas_src>
import functools

import jax
import jax.numpy as jnp
from jax.experimental import pallas as pl
from jax.experimental.pallas import tpu as pltpu


# ----------------------------------------------------------------------------
# Pallas kernel: fused 3-layer MLP on a (tm, seq_len) row tile
# ----------------------------------------------------------------------------
def _mlpfreq_kernel(mf_ref, x_ref,
                    w1_ref, b1_ref,
                    w2a_ref, w2b_ref, b2_ref,
                    w3_ref, b3_ref,
                    o_ref):
    w1 = w1_ref[...]
    cdt = w1.dtype                       # MXU input dtype (bf16 by default)
    mf = mf_ref[...].astype(cdt)
    x = x_ref[...].astype(cdt)

    # model_freq: ReLU(main_freq @ W1 + b1)                     -> [tm, 128]
    h = jnp.dot(mf, w1, preferred_element_type=jnp.float32)
    h = jnp.maximum(h + b1_ref[...], 0.0)

    # model_all layer 1: ReLU(concat([h, x]) @ W2 + b2)
    #                  = ReLU(h @ W2a + x @ W2b + b2)           -> [tm, 128]
    z = jnp.dot(h.astype(cdt), w2a_ref[...], preferred_element_type=jnp.float32)
    z = z + jnp.dot(x, w2b_ref[...], preferred_element_type=jnp.float32)
    z = jnp.maximum(z + b2_ref[...], 0.0)

    # model_all layer 2: z @ W3 + b3                            -> [tm, pred_len]
    out = jnp.dot(z.astype(cdt), w3_ref[...], preferred_element_type=jnp.float32)
    o_ref[...] = (out + b3_ref[...]).astype(o_ref.dtype)


# ----------------------------------------------------------------------------
# Wrapper
# ----------------------------------------------------------------------------
def _round_up(x, m):
    return ((x + m - 1) // m) * m


def _choose_tm(tm, m, seq_len, pred_len, in_bytes, out_bytes,
               vmem_block_budget=36 * 1024 * 1024):
    """Pick the row tile: multiple of 8, capped by problem size, a VMEM block
    budget (fits v7x's 64 MiB), and >= 2 grid steps so both v7x cores work."""
    tm = max(8, _round_up(min(tm, _round_up(m, 8)), 8))
    if m > 8:
        tm = min(tm, _round_up((m + 1) // 2, 8))      # keep at least 2 steps

    def block_bytes(t):
        # two row inputs + one output block, each double-buffered by the pipeline
        return 2 * (2 * t * seq_len * in_bytes) + 2 * t * pred_len * out_bytes

    while tm > 8 and block_bytes(tm) > vmem_block_budget:
        tm = max(8, _round_up(tm // 2, 8))
    return tm


@functools.partial(jax.jit, static_argnames=("tm", "compute_dtype"))
def mlpfreq_forward(main_freq, x, params, *, tm=1024, compute_dtype=jnp.bfloat16):
    """MLPfreq forward: main_freq, x: [..., seq_len] -> [..., pred_len]."""
    w1, b1, w2a, w2b, b2, w3, b3 = params
    seq_len = main_freq.shape[-1]
    pred_len = w3.shape[-1]
    h1 = w1.shape[-1]                     # 64 in the module
    h1p = _round_up(h1, 128)              # lane-dense hidden (zero-pad 64 -> 128)
    h2 = w2a.shape[-1]                    # 128

    # Weight prep: pad hidden to 128 lanes, cast MXU operands, biases stay f32.
    w1p = jnp.pad(w1, ((0, 0), (0, h1p - h1))).astype(compute_dtype)
    b1p = jnp.pad(b1, (0, h1p - h1)).reshape(1, -1).astype(jnp.float32)
    w2ap = jnp.pad(w2a, ((0, h1p - h1), (0, 0))).astype(compute_dtype)
    w2bp = w2b.astype(compute_dtype)
    b2p = b2.reshape(1, -1).astype(jnp.float32)
    w3p = w3.astype(compute_dtype)
    b3p = b3.reshape(1, -1).astype(jnp.float32)

    lead = main_freq.shape[:-1]
    mf2 = main_freq.reshape(-1, seq_len)
    x2 = x.reshape(-1, seq_len)
    m = mf2.shape[0]

    in_bytes = mf2.dtype.itemsize
    out_bytes = main_freq.dtype.itemsize
    tm_eff = _choose_tm(tm, m, seq_len, pred_len, in_bytes, out_bytes)

    # Pad rows only to the sublane multiple (8), never to tm.
    m_pad = _round_up(m, 8)
    if m_pad != m:
        mf2 = jnp.pad(mf2, ((0, m_pad - m), (0, 0)))
        x2 = jnp.pad(x2, ((0, m_pad - m), (0, 0)))

    grid = (pl.cdiv(m_pad, tm_eff),)

    def wspec(shape):
        return pl.BlockSpec(shape, lambda i: (0, 0))      # VMEM-resident weights

    def row_spec(last):
        return pl.BlockSpec((tm_eff, last), lambda i: (i, 0))

    flops = 2 * m * (seq_len * h1p + h1p * h2 + seq_len * h2 + h2 * pred_len)
    weight_bytes = sum(int(a.size) * a.dtype.itemsize
                       for a in (w1p, b1p, w2ap, w2bp, b2p, w3p, b3p))
    bytes_accessed = 2 * m * seq_len * in_bytes + m * pred_len * out_bytes + weight_bytes

    out = pl.pallas_call(
        _mlpfreq_kernel,
        out_shape=jax.ShapeDtypeStruct((m_pad, pred_len), main_freq.dtype),
        grid_spec=pltpu.PrefetchScalarGridSpec(
            num_scalar_prefetch=0,
            grid=grid,
            in_specs=[
                row_spec(seq_len),                 # main_freq row tile
                row_spec(seq_len),                 # x row tile
                wspec(w1p.shape),                  # W1  [seq_len, 128]
                wspec(b1p.shape),                  # b1  [1, 128]
                wspec(w2ap.shape),                 # W2a [128, 128]
                wspec(w2bp.shape),                 # W2b [seq_len, 128]
                wspec(b2p.shape),                  # b2  [1, 128]
                wspec(w3p.shape),                  # W3  [128, pred_len]
                wspec(b3p.shape),                  # b3  [1, pred_len]
            ],
            out_specs=pl.BlockSpec((tm_eff, pred_len), lambda i: (i, 0)),
        ),
        compiler_params=pltpu.CompilerParams(
            dimension_semantics=("parallel",),
            vmem_limit_bytes=48 * 1024 * 1024,
        ),
        cost_estimate=pl.CostEstimate(
            flops=flops, transcendentals=0, bytes_accessed=bytes_accessed),
    )(mf2, x2, w1p, b1p, w2ap, w2bp, b2p, w3p, b3p)

    if m_pad != m:
        out = out[:m]
    return out.reshape(*lead, pred_len)


# ----------------------------------------------------------------------------
# FAN "normalize" path: FFT top-k filter (XLA) + Pallas MLPfreq
# ----------------------------------------------------------------------------
def main_freq_part(x, k, rfft=True):
    """x: [bs, length, dim]; FFT along the time axis (axis=1)."""
    # TODO(synk): rfft/irfft/top-k have no Pallas equivalent; kept as XLA ops.
    if rfft:
        xf = jnp.fft.rfft(x, axis=1)
    else:
        xf = jnp.fft.fft(x, axis=1)
    mag_t = jnp.swapaxes(jnp.abs(xf), 1, 2)                    # [bs, dim, F]
    _, idx = jax.lax.top_k(mag_t, k)                           # [bs, dim, k]
    mask = jnp.sum(jax.nn.one_hot(idx, mag_t.shape[-1], dtype=x.dtype), axis=-2)
    mask = jnp.swapaxes(mask, 1, 2)                            # [bs, F, dim]
    xf_filtered = xf * mask
    if rfft:
        x_filtered = jnp.fft.irfft(xf_filtered, n=x.shape[1], axis=1)
    else:
        x_filtered = jnp.real(jnp.fft.ifft(xf_filtered, axis=1))
    x_filtered = x_filtered.astype(x.dtype)
    return x - x_filtered, x_filtered


def fan_normalize(batch_x, params, freq_topk=20, rfft=True,
                  tm=1024, compute_dtype=jnp.bfloat16):
    """FAN.forward(batch_x, mode='n'): returns (norm_input, pred_main_freq_signal)."""
    norm_input, x_filtered = main_freq_part(batch_x, freq_topk, rfft)
    pred_main = mlpfreq_forward(jnp.swapaxes(x_filtered, 1, 2),
                                jnp.swapaxes(batch_x, 1, 2),
                                params, tm=tm, compute_dtype=compute_dtype)
    return norm_input, jnp.swapaxes(pred_main, 1, 2)


# ----------------------------------------------------------------------------
# Parameters & references
# ----------------------------------------------------------------------------
def init_params(key, seq_len, pred_len, dtype=jnp.float32):
    """Deterministic synthetic params matching nn.Linear shapes (stored transposed)."""
    k1, k2, k3, k4, k5, k6 = jax.random.split(key, 6)
    w1 = jax.random.normal(k1, (seq_len, 64), dtype) * (1.0 / jnp.sqrt(seq_len))
    b1 = jax.random.normal(k2, (64,), dtype) * 0.01
    fan_in = 64 + seq_len
    w2 = jax.random.normal(k3, (fan_in, 128), dtype) * (1.0 / jnp.sqrt(fan_in))
    w2a, w2b = w2[:64], w2[64:]
    b2 = jax.random.normal(k4, (128,), dtype) * 0.01
    w3 = jax.random.normal(k5, (128, pred_len), dtype) * (1.0 / jnp.sqrt(128.0))
    b3 = jax.random.normal(k6, (pred_len,), dtype) * 0.01
    return (w1, b1, w2a, w2b, b2, w3, b3)


def reference_forward(main_freq, x, params):
    """Pure-f32 reference (exact PyTorch semantics)."""
    w1, b1, w2a, w2b, b2, w3, b3 = params
    h = jax.nn.relu(main_freq @ w1 + b1)
    inp = jnp.concatenate([h, x], axis=-1)
    w2 = jnp.concatenate([w2a, w2b], axis=0)
    z = jax.nn.relu(inp @ w2 + b2)
    return z @ w3 + b3


def reference_forward_matched(main_freq, x, params, compute_dtype):
    """Reference with the same bf16 cast points as the kernel (f32 accumulation)."""
    w1, b1, w2a, w2b, b2, w3, b3 = params
    c = lambda a: a.astype(compute_dtype)
    h = jnp.dot(c(main_freq), c(w1), preferred_element_type=jnp.float32) + b1
    h = jnp.maximum(h, 0.0)
    z = (jnp.dot(c(h), c(w2a), preferred_element_type=jnp.float32)
         + jnp.dot(c(x), c(w2b), preferred_element_type=jnp.float32) + b2)
    z = jnp.maximum(z, 0.0)
    return jnp.dot(c(z), c(w3), preferred_element_type=jnp.float32) + b3


# ----------------------------------------------------------------------------
# Self-test
# ----------------------------------------------------------------------------
if __name__ == "__main__":
    seq_len, pred_len, enc_in, batch = 16, 8, 4, 2
    cdt = jnp.bfloat16

    key = jax.random.PRNGKey(0)
    kp, kf, kx, kb = jax.random.split(key, 4)
    params = init_params(kp, seq_len, pred_len)

    # --- check 1: MLPfreq kernel, M = batch*enc_in = 8 (single grid step) ---
    main_freq = jax.random.normal(kf, (batch, enc_in, seq_len), jnp.float32)
    x = jax.random.normal(kx, (batch, enc_in, seq_len), jnp.float32)
    out = jax.block_until_ready(mlpfreq_forward(main_freq, x, params, compute_dtype=cdt))
    assert out.shape == (batch, enc_in, pred_len), out.shape
    ref_m = reference_forward_matched(main_freq, x, params, cdt)
    assert jnp.allclose(out, ref_m, atol=2e-3, rtol=2e-3), "mismatch vs matched ref"
    # drift guard against the pure-f32 reference (bf16 matmul inputs -> small drift)
    assert float(jnp.max(jnp.abs(out - reference_forward(main_freq, x, params)))) < 0.25

    # --- check 2: ragged M = 15 (pad rows to 16, two grid steps) ---
    mf_b = jax.random.normal(kf, (3, 5, seq_len), jnp.float32)
    x_b = jax.random.normal(kx, (3, 5, seq_len), jnp.float32)
    out2 = jax.block_until_ready(mlpfreq_forward(mf_b, x_b, params, compute_dtype=cdt))
    assert out2.shape == (3, 5, pred_len), out2.shape
    ref2 = reference_forward_matched(mf_b, x_b, params, cdt)
    assert jnp.allclose(out2, ref2, atol=2e-3, rtol=2e-3), "mismatch vs matched ref (ragged)"

    # --- check 3: full FAN normalize path (FFT filter in XLA + Pallas MLP) ---
    batch_x = jax.random.normal(kb, (batch, seq_len, enc_in), jnp.float32)
    norm_input, pred_main = fan_normalize(batch_x, params, freq_topk=3, compute_dtype=cdt)
    norm_input = jax.block_until_ready(norm_input)
    pred_main = jax.block_until_ready(pred_main)
    assert norm_input.shape == batch_x.shape
    assert pred_main.shape == (batch, pred_len, enc_in), pred_main.shape
    _, x_filt = main_freq_part(batch_x, 3, rfft=True)
    ref_main = jnp.swapaxes(
        reference_forward_matched(jnp.swapaxes(x_filt, 1, 2),
                                  jnp.swapaxes(batch_x, 1, 2), params, cdt), 1, 2)
    assert jnp.allclose(pred_main, ref_main, atol=2e-3, rtol=2e-3), "mismatch in FAN path"

    print("KERNEL_OK")
</pallas_src>

<mosaic_0001>
module attributes {stable_mosaic.version = 11 : i64} {
  func.func @_mlpfreq_kernel(%arg0: i32, %arg1: memref<8x16xf32, #tpu.memory_space<vmem>>, %arg2: memref<8x16xf32, #tpu.memory_space<vmem>>, %arg3: memref<16x128xbf16, #tpu.memory_space<vmem>>, %arg4: memref<1x128xf32, #tpu.memory_space<vmem>>, %arg5: memref<128x128xbf16, #tpu.memory_space<vmem>>, %arg6: memref<16x128xbf16, #tpu.memory_space<vmem>>, %arg7: memref<1x128xf32, #tpu.memory_space<vmem>>, %arg8: memref<128x8xbf16, #tpu.memory_space<vmem>>, %arg9: memref<1x8xf32, #tpu.memory_space<vmem>>, %arg10: memref<8x8xf32, #tpu.memory_space<vmem>>) attributes {dimension_semantics = [#tpu.dimension_semantics<parallel>], iteration_bounds = array<i64: 1>, scalar_prefetch = 0 : i64, scratch_operands = 0 : i64, tpu.core_type = #tpu.core_type<tc>, window_params = [{transform_indices = @transform_0, window_bounds = array<i64: 8, 16>}, {transform_indices = @transform_1, window_bounds = array<i64: 8, 16>}, {pipeline_mode = #tpu.pipeline_mode<synchronous>, transform_indices = @transform_2, window_bounds = array<i64: 16, 128>}, {pipeline_mode = #tpu.pipeline_mode<synchronous>, transform_indices = @transform_3, window_bounds = array<i64: 1, 128>}, {pipeline_mode = #tpu.pipeline_mode<synchronous>, transform_indices = @transform_4, window_bounds = array<i64: 128, 128>}, {pipeline_mode = #tpu.pipeline_mode<synchronous>, transform_indices = @transform_5, window_bounds = array<i64: 16, 128>}, {pipeline_mode = #tpu.pipeline_mode<synchronous>, transform_indices = @transform_6, window_bounds = array<i64: 1, 128>}, {pipeline_mode = #tpu.pipeline_mode<synchronous>, transform_indices = @transform_7, window_bounds = array<i64: 128, 8>}, {pipeline_mode = #tpu.pipeline_mode<synchronous>, transform_indices = @transform_8, window_bounds = array<i64: 1, 8>}, {transform_indices = @transform_9, window_bounds = array<i64: 8, 8>}]} {
    %c0 = arith.constant 0 : index
    %c0_0 = arith.constant 0 : index
    %0 = vector.load %arg3[%c0, %c0_0] : memref<16x128xbf16, #tpu.memory_space<vmem>>, vector<16x128xbf16>
    %c0_1 = arith.constant 0 : index
    %c0_2 = arith.constant 0 : index
    %1 = vector.load %arg1[%c0_1, %c0_2] : memref<8x16xf32, #tpu.memory_space<vmem>>, vector<8x16xf32>
    %2 = arith.truncf %1 : vector<8x16xf32> to vector<8x16xbf16>
    %c0_3 = arith.constant 0 : index
    %c0_4 = arith.constant 0 : index
    %3 = vector.load %arg2[%c0_3, %c0_4] : memref<8x16xf32, #tpu.memory_space<vmem>>, vector<8x16xf32>
    %4 = arith.truncf %3 : vector<8x16xf32> to vector<8x16xbf16>
    %cst = arith.constant dense<0.000000e+00> : vector<8x128xf32>
    %5 = tpu.matmul %2, %0, %cst {dimension_numbers = #tpu.dot_dimension_numbers<[1], [0], [0], [1], [0, 0, 1, 1], [], []>} : vector<8x16xbf16>, vector<16x128xbf16>, vector<8x128xf32> -> vector<8x128xf32>
    %c0_5 = arith.constant 0 : index
    %c0_6 = arith.constant 0 : index
    %6 = vector.load %arg4[%c0_5, %c0_6] : memref<1x128xf32, #tpu.memory_space<vmem>>, vector<1x128xf32>
    %7 = vector.broadcast %6 : vector<1x128xf32> to vector<8x128xf32>
    %8 = arith.addf %5, %7 : vector<8x128xf32>
    %cst_7 = arith.constant 0.000000e+00 : f32
    %9 = vector.broadcast %cst_7 : f32 to vector<8x128xf32>
    %10 = arith.maximumf %8, %9 : vector<8x128xf32>
    %11 = arith.truncf %10 : vector<8x128xf32> to vector<8x128xbf16>
    %c0_8 = arith.constant 0 : index
    %c0_9 = arith.constant 0 : index
    %12 = vector.load %arg5[%c0_8, %c0_9] : memref<128x128xbf16, #tpu.memory_space<vmem>>, vector<128x128xbf16>
    %cst_10 = arith.constant dense<0.000000e+00> : vector<8x128xf32>
    %13 = tpu.matmul %11, %12, %cst_10 {dimension_numbers = #tpu.dot_dimension_numbers<[1], [0], [0], [1], [0, 0, 1, 1], [], []>} : vector<8x128xbf16>, vector<128x128xbf16>, vector<8x128xf32> -> vector<8x128xf32>
    %c0_11 = arith.constant 0 : index
    %c0_12 = arith.constant 0 : index
    %14 = vector.load %arg6[%c0_11, %c0_12] : memref<16x128xbf16, #tpu.memory_space<vmem>>, vector<16x128xbf16>
    %cst_13 = arith.constant dense<0.000000e+00> : vector<8x128xf32>
    %15 = tpu.matmul %4, %14, %cst_13 {dimension_numbers = #tpu.dot_dimension_numbers<[1], [0], [0], [1], [0, 0, 1, 1], [], []>} : vector<8x16xbf16>, vector<16x128xbf16>, vector<8x128xf32> -> vector<8x128xf32>
    %16 = arith.addf %13, %15 : vector<8x128xf32>
    %c0_14 = arith.constant 0 : index
    %c0_15 = arith.constant 0 : index
    %17 = vector.load %arg7[%c0_14, %c0_15] : memref<1x128xf32, #tpu.memory_space<vmem>>, vector<1x128xf32>
    %18 = vector.broadcast %17 : vector<1x128xf32> to vector<8x128xf32>
    %19 = arith.addf %16, %18 : vector<8x128xf32>
    %cst_16 = arith.constant 0.000000e+00 : f32
    %20 = vector.broadcast %cst_16 : f32 to vector<8x128xf32>
    %21 = arith.maximumf %19, %20 : vector<8x128xf32>
    %22 = arith.truncf %21 : vector<8x128xf32> to vector<8x128xbf16>
    %c0_17 = arith.constant 0 : index
    %c0_18 = arith.constant 0 : index
    %23 = vector.load %arg8[%c0_17, %c0_18] : memref<128x8xbf16, #tpu.memory_space<vmem>>, vector<128x8xbf16>
    %cst_19 = arith.constant dense<0.000000e+00> : vector<8x8xf32>
    %24 = tpu.matmul %22, %23, %cst_19 {dimension_numbers = #tpu.dot_dimension_numbers<[1], [0], [0], [1], [0, 0, 1, 1], [], []>} : vector<8x128xbf16>, vector<128x8xbf16>, vector<8x8xf32> -> vector<8x8xf32>
    %c0_20 = arith.constant 0 : index
    %c0_21 = arith.constant 0 : index
    %25 = vector.load %arg9[%c0_20, %c0_21] : memref<1x8xf32, #tpu.memory_space<vmem>>, vector<1x8xf32>
    %26 = vector.broadcast %25 : vector<1x8xf32> to vector<8x8xf32>
    %27 = arith.addf %24, %26 : vector<8x8xf32>
    %c0_22 = arith.constant 0 : index
    %c0_23 = arith.constant 0 : index
    %28 = vector.load %arg10[%c0_22, %c0_23] : memref<8x8xf32, #tpu.memory_space<vmem>>, vector<8x8xf32>
    tpu.vector_store %arg10[%c0_22, %c0_23], %27 {strides = array<i32>} : memref<8x8xf32, #tpu.memory_space<vmem>>, vector<8x8xf32>,
    return
  }
  func.func @transform_0(%arg0: i32) -> (i32, i32) {
    %c0_i32 = arith.constant 0 : i32
    %c0_i32_0 = arith.constant 0 : i32
    return %arg0, %c0_i32 : i32, i32
  }
  func.func @transform_1(%arg0: i32) -> (i32, i32) {
    %c0_i32 = arith.constant 0 : i32
    %c0_i32_0 = arith.constant 0 : i32
    return %arg0, %c0_i32 : i32, i32
  }
  func.func @transform_2(%arg0: i32) -> (i32, i32) {
    %c0_i32 = arith.constant 0 : i32
    %c0_i32_0 = arith.constant 0 : i32
    %c0_i32_1 = arith.constant 0 : i32
    return %c0_i32, %c0_i32_0 : i32, i32
  }
  func.func @transform_3(%arg0: i32) -> (i32, i32) {
    %c0_i32 = arith.constant 0 : i32
    %c0_i32_0 = arith.constant 0 : i32
    %c0_i32_1 = arith.constant 0 : i32
    return %c0_i32, %c0_i32_0 : i32, i32
  }
  func.func @transform_4(%arg0: i32) -> (i32, i32) {
    %c0_i32 = arith.constant 0 : i32
    %c0_i32_0 = arith.constant 0 : i32
    %c0_i32_1 = arith.constant 0 : i32
    return %c0_i32, %c0_i32_0 : i32, i32
  }
  func.func @transform_5(%arg0: i32) -> (i32, i32) {
    %c0_i32 = arith.constant 0 : i32
    %c0_i32_0 = arith.constant 0 : i32
    %c0_i32_1 = arith.constant 0 : i32
    return %c0_i32, %c0_i32_0 : i32, i32
  }
  func.func @transform_6(%arg0: i32) -> (i32, i32) {
    %c0_i32 = arith.constant 0 : i32
    %c0_i32_0 = arith.constant 0 : i32
    %c0_i32_1 = arith.constant 0 : i32
    return %c0_i32, %c0_i32_0 : i32, i32
  }
  func.func @transform_7(%arg0: i32) -> (i32, i32) {
    %c0_i32 = arith.constant 0 : i32
    %c0_i32_0 = arith.constant 0 : i32
    %c0_i32_1 = arith.constant 0 : i32
    return %c0_i32, %c0_i32_0 : i32, i32
  }
  func.func @transform_8(%arg0: i32) -> (i32, i32) {
    %c0_i32 = arith.constant 0 : i32
    %c0_i32_0 = arith.constant 0 : i32
    %c0_i32_1 = arith.constant 0 : i32
    return %c0_i32, %c0_i32_0 : i32, i32
  }
  func.func @transform_9(%arg0: i32) -> (i32, i32) {
    %c0_i32 = arith.constant 0 : i32
    %c0_i32_0 = arith.constant 0 : i32
    return %arg0, %c0_i32 : i32, i32
  }
}

</mosaic_0001>

<llo_original>
// kernel: mlpfreq_forward.1
$region0: #{mlpfreq_forward.1}
  #allocation0 [shape = 'u32[]', space=smem, size = 0x4, offset = 0x4, fixed_abs, tag = 'smem constant byte address 0x4 - core index']
  #allocation1 [shape = 'u32[144,128]{1,0:T(1,128)}', space=vmem, size = 0x12000, scoped, tag = 'internal scratch']
  %s0 = inlined_call_operand.vmem [shape: f32[8,16], index: 0, kind: input, shape index: {}]
  %s1 = inlined_call_operand.vmem [shape: f32[8,16], index: 1, kind: input, shape index: {}]
  %s2 = inlined_call_operand.vmem [shape: bf16[16,128], index: 2, kind: input, shape index: {}]
  %s3 = inlined_call_operand.vmem [shape: f32[1,128], index: 3, kind: input, shape index: {}]
  %s4 = inlined_call_operand.vmem [shape: bf16[128,128], index: 4, kind: input, shape index: {}]
  %s5 = inlined_call_operand.vmem [shape: bf16[16,128], index: 5, kind: input, shape index: {}]
  %s6 = inlined_call_operand.vmem [shape: f32[1,128], index: 6, kind: input, shape index: {}]
  %s7 = inlined_call_operand.vmem [shape: bf16[128,8], index: 7, kind: input, shape index: {}]
  %s8 = inlined_call_operand.vmem [shape: f32[1,8], index: 8, kind: input, shape index: {}]
  %s9 = inlined_call_operand.hbm [shape: f32[8,8], index: 9, kind: output, shape index: {}]
  %s10 = sld [smem:[#allocation0]]
  $region46: #{mlpfreq_forward.1} parent=0
    _
  %s12 = ssub.s32 1, %s10
  %s13 = scalar_select 0, %s12, %s10
  $region1: #{mlpfreq_forward.1} parent=0
    #allocation2 [shape = 'u8[4096]{0}', space=vmem, size = 0x1000, scoped, tag = 'output window, operand 0, single buffered']
    #allocation3 [shape = 's32[1]{0}', space=sflag, size = 0x4, scoped, tag = 'scoped memory for mlpfreq_forward.1']
    %14 = vsyncpa [#allocation3], 0
    // Predicated region
    $region2: #{mlpfreq_forward.1} parent=1 // pred_check
      _
    $region3: #{mlpfreq_forward.1} parent=1 // pred_check_branch
      %16 = sbr.rel (0) target = $region5
    $region4: #{mlpfreq_forward.1} parent=1 // pred_region
      _
    $region5: #{mlpfreq_forward.1} parent=1 // pred_fallthru
      _
    // Predicated region
    $region6: #{mlpfreq_forward.1} parent=1 // pred_check
      _
    $region7: #{mlpfreq_forward.1} parent=1 // pred_check_branch
      %18 = sbr.rel (0) target = $region9
    $region8: #{mlpfreq_forward.1} parent=1 // pred_region
      _
    $region9: #{mlpfreq_forward.1} parent=1 // pred_fallthru
      _
    // Predicated region
    $region10: #{mlpfreq_forward.1} parent=1 // pred_check
      _
    $region11: #{mlpfreq_forward.1} parent=1 // pred_check_branch
      %20 = sbr.rel (0) target = $region13
    $region12: #{mlpfreq_forward.1} parent=1 // pred_region
      _
    $region13: #{mlpfreq_forward.1} parent=1 // pred_fallthru
      _
    // Predicated region
    $region14: #{mlpfreq_forward.1} parent=1 // pred_check
      _
    $region15: #{mlpfreq_forward.1} parent=1 // pred_check_branch
      %22 = sbr.rel (0) target = $region17
    $region16: #{mlpfreq_forward.1} parent=1 // pred_region
      _
    $region17: #{mlpfreq_forward.1} parent=1 // pred_fallthru
      _
    // Predicated region
    $region18: #{mlpfreq_forward.1} parent=1 // pred_check
      _
    $region19: #{mlpfreq_forward.1} parent=1 // pred_check_branch
      %24 = sbr.rel (0) target = $region21
    $region20: #{mlpfreq_forward.1} parent=1 // pred_region
      _
    $region21: #{mlpfreq_forward.1} parent=1 // pred_fallthru
      _
    // Predicated region
    $region22: #{mlpfreq_forward.1} parent=1 // pred_check
      _
    $region23: #{mlpfreq_forward.1} parent=1 // pred_check_branch
      %26 = sbr.rel (0) target = $region25
    $region24: #{mlpfreq_forward.1} parent=1 // pred_region
      _
    $region25: #{mlpfreq_forward.1} parent=1 // pred_fallthru
      _
    // Predicated region
    $region26: #{mlpfreq_forward.1} parent=1 // pred_check
      _
    $region27: #{mlpfreq_forward.1} parent=1 // pred_check_branch
      %28 = sbr.rel (0) target = $region29
    $region28: #{mlpfreq_forward.1} parent=1 // pred_region
      _
    $region29: #{mlpfreq_forward.1} parent=1 // pred_fallthru
      _
    // Predicated region
    $region30: #{mlpfreq_forward.1} parent=1 // pred_check
      _
    $region31: #{mlpfreq_forward.1} parent=1 // pred_check_branch
      %30 = sbr.rel (0) target = $region33
    $region32: #{mlpfreq_forward.1} parent=1 // pred_region
      _
    $region33: #{mlpfreq_forward.1} parent=1 // pred_fallthru
      _
    // Predicated region
    $region34: #{mlpfreq_forward.1} parent=1 // pred_check
      _
    $region35: #{mlpfreq_forward.1} parent=1 // pred_check_branch
      %32 = sbr.rel (0) target = $region37
    $region36: #{mlpfreq_forward.1} parent=1 // pred_region
      _
    $region37: #{mlpfreq_forward.1} parent=1 // pred_fallthru
      _
    %v34 = vld [vmem:[%s2] sm:$0xf]
    %v35 = vld [vmem:[%s2 + $0x4] sm:$0xf]
    %v36 = vld [vmem:[%s0] sm:$0xff]
    %v37 = vpack.c.bf16 %v36, %v36
    %v38 = vld [vmem:[%s1] sm:$0xff]
    %v39 = vpack.c.bf16 %v38, %v38
    %v40 = vld [vmem:[%s3] sm:$0x1]
    %v42 = vlaneseq
    %v43 = vshrl.u32 %v42, 7
    %v44 = vsub.s32 0, %v43
    %v45 = vrot.slane %v40, %v44
    %v49 = vunpack.c.l.b16 %v34
    %v50 = vunpack.c.l.b16 %v35
    %v51 = vpack.c.b16 %v50, %v49
    %vm53 = vcmask 130048
    %v55 = vsel %vm53, %v37, 0
    %57 = vmatprep.subr.bf16.mxu0 0
    %58 = vmatpush1.bf16.msra.mxu0 %v51
    %59 = vmatprep.subr.bf16.mxu0 0
    %60 = vmatpush1.bf16.msra.mxu0 0
    %61 = vmatprep.subr.bf16.mxu0 0
    %62 = vmatpush1.bf16.msra.mxu0 0
    %63 = vmatprep.subr.bf16.mxu0 0
    %64 = vmatpush1.bf16.msra.mxu0 0
    %65 = vmatprep.subr.bf16.mxu0 0
    %66 = vmatpush1.bf16.msra.mxu0 0
    %67 = vmatprep.subr.bf16.mxu0 0
    %68 = vmatpush1.bf16.msra.mxu0 0
    %69 = vmatprep.subr.bf16.mxu0 0
    %70 = vmatpush1.bf16.msra.mxu0 0
    %71 = vmatprep.subr.bf16.mxu0 0
    %72 = vmatpush1.bf16.msra.mxu0 0
    %73 = vmatprep.subr.bf16.mxu0 0
    %74 = vmatpush1.bf16.msra.mxu0 0
    %75 = vmatprep.subr.bf16.mxu0 0
    %76 = vmatpush1.bf16.msra.mxu0 0
    %77 = vmatprep.subr.bf16.mxu0 0
    %78 = vmatpush1.bf16.msra.mxu0 0
    %79 = vmatprep.subr.bf16.mxu0 0
    %80 = vmatpush1.bf16.msra.mxu0 0
    %81 = vmatprep.subr.bf16.mxu0 0
    %82 = vmatpush1.bf16.msra.mxu0 0
    %83 = vmatprep.subr.bf16.mxu0 0
    %84 = vmatpush1.bf16.msra.mxu0 0
    %85 = vmatprep.subr.bf16.mxu0 0
    %86 = vmatpush1.bf16.msra.mxu0 0
    %87 = vmatprep.subr.bf16.mxu0 0
    %88 = vmatpush1.bf16.msra.mxu0 0
    %89 = vmatprep.mubr.bf16.mxu0 0
    %90 = vmatmul.mubr.bf16.gmra.mrb[0].mxu0 %v55
    %v91 = vpop.f32.mrb[0].mxu0
    %v92 = vadd.f32 %v45, %v91
    %v93 = vpop.f32.mrb[0].mxu0
    %v94 = vpop.f32.mrb[0].mxu0
    %v95 = vpop.f32.mrb[0].mxu0
    %96 = vdwg.mxu0
    %v97 = vmax.f32 %v92, 0.0
    %v98 = vpack.c.bf16 %v97, %v97
    %v99 = vld [vmem:[%s4] sm:$0xf]
    %v100 = vld [vmem:[%s4 + $0x4] sm:$0xf]
    %v101 = vld [vmem:[%s4 + $0x8] sm:$0xf]
    %v102 = vld [vmem:[%s4 + $0xc] sm:$0xf]
    %v103 = vld [vmem:[%s4 + $0x10] sm:$0xf]
    %v104 = vld [vmem:[%s4 + $0x14] sm:$0xf]
    %v105 = vld [vmem:[%s4 + $0x18] sm:$0xf]
    %v106 = vld [vmem:[%s4 + $0x1c] sm:$0xf]
    %v107 = vld [vmem:[%s4 + $0x20] sm:$0xf]
    %v108 = vld [vmem:[%s4 + $0x24] sm:$0xf]
    %v109 = vld [vmem:[%s4 + $0x28] sm:$0xf]
    %v110 = vld [vmem:[%s4 + $0x2c] sm:$0xf]
    %v111 = vld [vmem:[%s4 + $0x30] sm:$0xf]
    %v112 = vld [vmem:[%s4 + $0x34] sm:$0xf]
    %v113 = vld [vmem:[%s4 + $0x38] sm:$0xf]
    %v114 = vld [vmem:[%s4 + $0x3c] sm:$0xf]
    %v115 = vld [vmem:[%s5] sm:$0xf]
    %v116 = vld [vmem:[%s5 + $0x4] sm:$0xf]
    %v119 = vunpack.c.l.b16 %v115
    %v120 = vunpack.c.l.b16 %v116
    %v121 = vpack.c.b16 %v120, %v119
    %v124 = vsel %vm53, %v39, 0
    %126 = vmatprep.subr.bf16.mxu0 0
    %127 = vmatpush1.bf16.msra.mxu0 %v121
    %128 = vmatprep.subr.bf16.mxu0 0
    %129 = vmatpush1.bf16.msra.mxu0 0
    %130 = vmatprep.subr.bf16.mxu0 0
    %131 = vmatpush1.bf16.msra.mxu0 0
    %132 = vmatprep.subr.bf16.mxu0 0
    %133 = vmatpush1.bf16.msra.mxu0 0
    %134 = vmatprep.subr.bf16.mxu0 0
    %135 = vmatpush1.bf16.msra.mxu0 0
    %136 = vmatprep.subr.bf16.mxu0 0
    %137 = vmatpush1.bf16.msra.mxu0 0
    %138 = vmatprep.subr.bf16.mxu0 0
    %139 = vmatpush1.bf16.msra.mxu0 0
    %140 = vmatprep.subr.bf16.mxu0 0
    %141 = vmatpush1.bf16.msra.mxu0 0
    %142 = vmatprep.subr.bf16.mxu0 0
    %143 = vmatpush1.bf16.msra.mxu0 0
    %144 = vmatprep.subr.bf16.mxu0 0
    %145 = vmatpush1.bf16.msra.mxu0 0
    %146 = vmatprep.subr.bf16.mxu0 0
    %147 = vmatpush1.bf16.msra.mxu0 0
    %148 = vmatprep.subr.bf16.mxu0 0
    %149 = vmatpush1.bf16.msra.mxu0 0
    %150 = vmatprep.subr.bf16.mxu0 0
    %151 = vmatpush1.bf16.msra.mxu0 0
    %152 = vmatprep.subr.bf16.mxu0 0
    %153 = vmatpush1.bf16.msra.mxu0 0
    %154 = vmatprep.subr.bf16.mxu0 0
    %155 = vmatpush1.bf16.msra.mxu0 0
    %156 = vmatprep.subr.bf16.mxu0 0
    %157 = vmatpush1.bf16.msra.mxu0 0
    %158 = vmatprep.mubr.bf16.mxu0 0
    %159 = vmatmul.mubr.bf16.gmra.mrb[0].mxu0 %v124
    %v160 = vpop.f32.mrb[0].mxu0
    %v161 = vadd.f32 0.0, %v160
    %v162 = vpop.f32.mrb[0].mxu0
    %v163 = vpop.f32.mrb[0].mxu0
    %v164 = vpop.f32.mrb[0].mxu0
    %165 = vdwg.mxu0
    %v182 = vunpack.c.l.b16 %v99
    %v183 = vunpack.c.l.b16 %v100
    %v184 = vunpack.c.l.b16 %v101
    %v185 = vunpack.c.l.b16 %v102
    %v186 = vunpack.c.l.b16 %v103
    %v187 = vunpack.c.l.b16 %v104
    %v188 = vunpack.c.l.b16 %v105
    %v189 = vunpack.c.l.b16 %v106
    %v190 = vunpack.c.l.b16 %v107
    %v191 = vunpack.c.l.b16 %v108
    %v192 = vunpack.c.l.b16 %v109
    %v193 = vunpack.c.l.b16 %v110
    %v194 = vunpack.c.l.b16 %v111
    %v195 = vunpack.c.l.b16 %v112
    %v196 = vunpack.c.l.b16 %v113
    %v197 = vunpack.c.l.b16 %v114
    %v198 = vpack.c.b16 %v183, %v182
    %v199 = vpack.c.b16 %v185, %v184
    %v200 = vpack.c.b16 %v187, %v186
    %v201 = vpack.c.b16 %v189, %v188
    %v202 = vpack.c.b16 %v191, %v190
    %v203 = vpack.c.b16 %v193, %v192
    %v204 = vpack.c.b16 %v195, %v194
    %v205 = vpack.c.b16 %v197, %v196
    %214 = vmatprep.subr.bf16.mxu0 0
    %215 = vmatpush1.bf16.msra.mxu0 %v198
    %216 = vmatprep.subr.bf16.mxu0 0
    %217 = vmatpush1.bf16.msra.mxu0 %v199
    %218 = vmatprep.subr.bf16.mxu0 0
    %219 = vmatpush1.bf16.msra.mxu0 %v200
    %220 = vmatprep.subr.bf16.mxu0 0
    %221 = vmatpush1.bf16.msra.mxu0 %v201
    %222 = vmatprep.subr.bf16.mxu0 0
    %223 = vmatpush1.bf16.msra.mxu0 %v202
    %224 = vmatprep.subr.bf16.mxu0 0
    %225 = vmatpush1.bf16.msra.mxu0 %v203
    %226 = vmatprep.subr.bf16.mxu0 0
    %227 = vmatpush1.bf16.msra.mxu0 %v204
    %228 = vmatprep.subr.bf16.mxu0 0
    %229 = vmatpush1.bf16.msra.mxu0 %v205
    %230 = vmatprep.subr.bf16.mxu0 0
    %231 = vmatpush1.bf16.msra.mxu0 0
    %232 = vmatprep.subr.bf16.mxu0 0
    %233 = vmatpush1.bf16.msra.mxu0 0
    %234 = vmatprep.subr.bf16.mxu0 0
    %235 = vmatpush1.bf16.msra.mxu0 0
    %236 = vmatprep.subr.bf16.mxu0 0
    %237 = vmatpush1.bf16.msra.mxu0 0
    %238 = vmatprep.subr.bf16.mxu0 0
    %239 = vmatpush1.bf16.msra.mxu0 0
    %240 = vmatprep.subr.bf16.mxu0 0
    %241 = vmatpush1.bf16.msra.mxu0 0
    %242 = vmatprep.subr.bf16.mxu0 0
    %243 = vmatpush1.bf16.msra.mxu0 0
    %244 = vmatprep.subr.bf16.mxu0 0
    %245 = vmatpush1.bf16.msra.mxu0 0
    %246 = vmatprep.mubr.bf16.mxu0 0
    %247 = vmatmul.mubr.bf16.gmra.mrb[0].mxu0 %v98
    %v248 = vpop.f32.mrb[0].mxu0
    %v249 = vadd.f32 %v161, %v248
    %v250 = vpop.f32.mrb[0].mxu0
    %v251 = vpop.f32.mrb[0].mxu0
    %v252 = vpop.f32.mrb[0].mxu0
    %253 = vdwg.mxu0
    %v254 = vld [vmem:[%s6] sm:$0x1]
    %v256 = vlaneseq
    %v257 = vshrl.u32 %v256, 7
    %v258 = vsub.s32 0, %v257
    %v259 = vrot.slane %v254, %v258
    %v261 = vadd.f32 %v249, %v259
    %v262 = vmax.f32 %v261, 0.0
    %v263 = vpack.c.bf16 %v262, %v262
    %v264 = vld [vmem:[%s7] sm:$0xf]
    %v265 = vld [vmem:[%s7 + $0x4] sm:$0xf]
    %v266 = vld [vmem:[%s7 + $0x8] sm:$0xf]
    %v267 = vld [vmem:[%s7 + $0xc] sm:$0xf]
    %v268 = vld [vmem:[%s7 + $0x10] sm:$0xf]
    %v269 = vld [vmem:[%s7 + $0x14] sm:$0xf]
    %v270 = vld [vmem:[%s7 + $0x18] sm:$0xf]
    %v271 = vld [vmem:[%s7 + $0x1c] sm:$0xf]
    %v272 = vld [vmem:[%s7 + $0x20] sm:$0xf]
    %v273 = vld [vmem:[%s7 + $0x24] sm:$0xf]
    %v274 = vld [vmem:[%s7 + $0x28] sm:$0xf]
    %v275 = vld [vmem:[%s7 + $0x2c] sm:$0xf]
    %v276 = vld [vmem:[%s7 + $0x30] sm:$0xf]
    %v277 = vld [vmem:[%s7 + $0x34] sm:$0xf]
    %v278 = vld [vmem:[%s7 + $0x38] sm:$0xf]
    %v279 = vld [vmem:[%s7 + $0x3c] sm:$0xf]
    %v280 = vld [vmem:[%s8] sm:$0x1]
    %v282 = vlaneseq
    %v283 = vshrl.u32 %v282, 7
    %v284 = vsub.s32 0, %v283
    %v285 = vrot.slane %v280, %v284
    %v303 = vunpack.c.l.b16 %v264
    %v304 = vunpack.c.l.b16 %v265
    %v305 = vunpack.c.l.b16 %v266
    %v306 = vunpack.c.l.b16 %v267
    %v307 = vunpack.c.l.b16 %v268
    %v308 = vunpack.c.l.b16 %v269
    %v309 = vunpack.c.l.b16 %v270
    %v310 = vunpack.c.l.b16 %v271
    %v311 = vunpack.c.l.b16 %v272
    %v312 = vunpack.c.l.b16 %v273
    %v313 = vunpack.c.l.b16 %v274
    %v314 = vunpack.c.l.b16 %v275
    %v315 = vunpack.c.l.b16 %v276
    %v316 = vunpack.c.l.b16 %v277
    %v317 = vunpack.c.l.b16 %v278
    %v318 = vunpack.c.l.b16 %v279
    %v319 = vpack.c.b16 %v304, %v303
    %v320 = vpack.c.b16 %v306, %v305
    %v321 = vpack.c.b16 %v308, %v307
    %v322 = vpack.c.b16 %v310, %v309
    %v323 = vpack.c.b16 %v312, %v311
    %v324 = vpack.c.b16 %v314, %v313
    %v325 = vpack.c.b16 %v316, %v315
    %v326 = vpack.c.b16 %v318, %v317
    %335 = vmatprep.subr.bf16.mxu0 0
    %336 = vmatpush1.bf16.msra.mxu0 %v319
    %337 = vmatprep.subr.bf16.mxu0 0
    %338 = vmatpush1.bf16.msra.mxu0 %v320
    %339 = vmatprep.subr.bf16.mxu0 0
    %340 = vmatpush1.bf16.msra.mxu0 %v321
    %341 = vmatprep.subr.bf16.mxu0 0
    %342 = vmatpush1.bf16.msra.mxu0 %v322
    %343 = vmatprep.subr.bf16.mxu0 0
    %344 = vmatpush1.bf16.msra.mxu0 %v323
    %345 = vmatprep.subr.bf16.mxu0 0
    %346 = vmatpush1.bf16.msra.mxu0 %v324
    %347 = vmatprep.subr.bf16.mxu0 0
    %348 = vmatpush1.bf16.msra.mxu0 %v325
    %349 = vmatprep.subr.bf16.mxu0 0
    %350 = vmatpush1.bf16.msra.mxu0 %v326
    %351 = vmatprep.subr.bf16.mxu0 0
    %352 = vmatpush1.bf16.msra.mxu0 0
    %353 = vmatprep.subr.bf16.mxu0 0
    %354 = vmatpush1.bf16.msra.mxu0 0
    %355 = vmatprep.subr.bf16.mxu0 0
    %356 = vmatpush1.bf16.msra.mxu0 0
    %357 = vmatprep.subr.bf16.mxu0 0
    %358 = vmatpush1.bf16.msra.mxu0 0
    %359 = vmatprep.subr.bf16.mxu0 0
    %360 = vmatpush1.bf16.msra.mxu0 0
    %361 = vmatprep.subr.bf16.mxu0 0
    %362 = vmatpush1.bf16.msra.mxu0 0
    %363 = vmatprep.subr.bf16.mxu0 0
    %364 = vmatpush1.bf16.msra.mxu0 0
    %365 = vmatprep.subr.bf16.mxu0 0
    %366 = vmatpush1.bf16.msra.mxu0 0
    %367 = vmatprep.mubr.bf16.mxu0 0
    %368 = vmatmul.mubr.bf16.gmra.mrb[0].mxu0 %v263
    %v369 = vpop.f32.mrb[0].mxu0
    %v370 = vadd.f32 %v285, %v369
    %v371 = vpop.f32.mrb[0].mxu0
    %v372 = vpop.f32.mrb[0].mxu0
    %v373 = vpop.f32.mrb[0].mxu0
    %374 = vdwg.mxu0
    %vm375 = vcmask 64512
    %376 = vst.msk [vmem:[#allocation2] sm:$0xff] %vm375, %v370
    // Predicated region
    $region38: #{mlpfreq_forward.1} parent=1 // pred_check
      _
    $region39: #{mlpfreq_forward.1} parent=1 // pred_check_branch
      %378 = sbr.rel (0) target = $region41
    $region40: #{mlpfreq_forward.1} parent=1 // pred_region
      %s380 = ssub.s32 128, 128
      %381 = vsyncadd [#allocation3], %s380
      %s383 = sshll.u32 [#allocation2], 4
      %s384 = int_to_ptr.vmem [resolvable:$true] %s383
      %386 = dma.vmem_to_hbm [thread:$0]  %s384, 128, %s9, [#allocation3]
    $region41: #{mlpfreq_forward.1} parent=1 // pred_fallthru
      _
    // Predicated region
    $region42: #{mlpfreq_forward.1} parent=1 // pred_check
      _
    $region43: #{mlpfreq_forward.1} parent=1 // pred_check_branch
      %388 = sbr.rel (0) target = $region45
    $region44: #{mlpfreq_forward.1} parent=1 // pred_region
      %389 = dma.done [#allocation3], 128
    $region45: #{mlpfreq_forward.1} parent=1 // pred_fallthru
      _
    %390 = vsyncpa [#allocation3], 1

</llo_original>
